<compile_context>
chip_gen: v5e
topology: v5e:2x2
jax: 0.10.0
libtpu: 0.0.40
codegen_flags: <defaults>
</compile_context>

<pallas_src>
import numpy as np
import jax
import jax.numpy as jnp
from jax.experimental import pallas as pl
from jax.experimental.pallas import tpu as pltpu


_TINY_BYPASS_BYTES = 1 << 20       # < 1 MiB: plain-JAX add is strictly better
_TARGET_X_BLOCK_BYTES = 4 << 20    # ~4 MiB x tiles sit at ~85% of HBM roofline
_VMEM_LIMIT_CAP = 48 << 20         # headroom on v7x (64 MiB physical VMEM)


def _add_pe_kernel(x_ref, pe_ref, o_ref):
    # x_ref: (tb, rows, D), pe_ref: (rows, D) -> broadcast add over batch tile.
    o_ref[...] = x_ref[...] + pe_ref[...]


def make_sinusoidal_pe(num_patches, embedding_dimension, dtype=jnp.float32):
    """Exactly the PyTorch buffer: angle = t / 10000**(2*(i//2)/D); sin even dims, cos odd."""
    pos = np.arange(num_patches, dtype=np.float32)[:, None]            # (N, 1)
    dim = np.arange(embedding_dimension, dtype=np.float32)[None, :]    # (1, D)
    angle = pos / np.power(10000.0, 2.0 * np.floor(dim / 2.0) / embedding_dimension)
    pe = np.where((np.arange(embedding_dimension)[None, :] % 2) == 0,
                  np.sin(angle), np.cos(angle)).astype(np.float32)
    return jnp.asarray(pe, dtype)                                       # (N, D)


def _sublane_multiple(dtype) -> int:
    # Sub-32-bit dtypes pack along sublanes: f32 -> 8, bf16 -> 16, int8/fp8 -> 32.
    return {4: 8, 2: 16, 1: 32}.get(jnp.dtype(dtype).itemsize, 8)


def _choose_tiles(B, N, D, itemsize, sublane):
    """Byte-based tile picker -> (batch_tile, row_tile)."""
    total = B * N * D * itemsize
    target = _TARGET_X_BLOCK_BYTES
    if total >= (2 << 20):
        # Keep at least ~4 pipeline steps so double-buffering has overlap to hide.
        target = min(target, max(total // 4, 256 << 10))
    row_bytes = B * D * itemsize                      # one patch row, full batch
    if row_bytes <= target:
        rows = min(N, max(1, target // row_bytes))
        if rows < N:
            rows = max(sublane, (rows // sublane) * sublane)
        return B, int(min(rows, N))
    # Huge B*D: even one full-batch row block blows the budget -> tile the batch
    # too, keeping the PE block resident and lane-dense.
    rows = int(min(N, sublane))
    tb = max(1, min(B, target // (rows * D * itemsize)))
    return int(tb), rows


def sinusoidal_position_embeddings(x, pe, *, block_rows=None, block_batch=None,
                                   force_pallas=False):
    """x: (B, N, D), pe: (N, D) -> x + pe.  Dropout is identity at inference."""
    B, N, D = x.shape
    assert pe.shape == (N, D), (pe.shape, (N, D))
    pe = pe.astype(x.dtype)            # host-side cast: no in-kernel convert

    itemsize = jnp.dtype(x.dtype).itemsize
    total_bytes = B * N * D * itemsize
    if (not force_pallas and block_rows is None and block_batch is None
            and total_bytes < _TINY_BYPASS_BYTES):
        # Tiny tensors: grid overhead + un-fusable call boundary dominate; let
        # XLA fuse the broadcast add into its neighbours instead.
        return x + pe[None]

    sublane = _sublane_multiple(x.dtype)
    tb_auto, rows_auto = _choose_tiles(B, N, D, itemsize, sublane)
    tb = int(min(block_batch if block_batch is not None else tb_auto, B))
    rows = int(min(block_rows if block_rows is not None else rows_auto, N))
    assert rows == N or rows % sublane == 0, (
        f"block_rows={rows} must be a multiple of {sublane} for dtype {x.dtype}")

    grid = (pl.cdiv(B, tb), pl.cdiv(N, rows))

    # Double-buffered footprint: 2x(x block) + 2x(out block) + 2x(pe block).
    x_block_bytes = tb * rows * D * itemsize
    pe_block_bytes = rows * D * itemsize
    vmem_need = 2 * (2 * x_block_bytes + pe_block_bytes)
    vmem_limit = int(min(max(2 * vmem_need, 32 << 20), _VMEM_LIMIT_CAP))

    return pl.pallas_call(
        _add_pe_kernel,
        out_shape=jax.ShapeDtypeStruct((B, N, D), x.dtype),
        grid=grid,
        in_specs=[
            pl.BlockSpec((tb, rows, D), lambda b, r: (b, r, 0)),   # x
            pl.BlockSpec((rows, D), lambda b, r: (r, 0)),          # positional embedding
        ],
        out_specs=pl.BlockSpec((tb, rows, D), lambda b, r: (b, r, 0)),
        # Same shape/dtype, elementwise: donors of x skip an extra HBM copy.
        input_output_aliases={0: 0},
        compiler_params=pltpu.CompilerParams(
            dimension_semantics=("parallel", "parallel"),
            vmem_limit_bytes=vmem_limit),
    )(x, pe)


def reference_jax(x, pe):
    # Eval-mode forward of the PyTorch module: add buffer, dropout = identity.
    return x + pe[None].astype(x.dtype)


if __name__ == "__main__":
    # Module defaults: embedding_dimension=384 (lane-dense: 3 * 128). Small shapes.
    B, N, D = 2, 16, 384
    x = jax.random.normal(jax.random.PRNGKey(0), (B, N, D), dtype=jnp.float32)
    pe = make_sinusoidal_pe(N, D)

    ref = reference_jax(x, pe)
    out = jax.block_until_ready(
        sinusoidal_position_embeddings(x, pe, force_pallas=True))
    assert out.shape == (B, N, D), out.shape
    assert jnp.allclose(out, ref, atol=1e-6, rtol=1e-6), \
        float(jnp.max(jnp.abs(out - ref)))

    # Exercise the tiled path: multi-step grid + masked partial last row block
    # (N = 200 is not a multiple of the 64-row tile).
    B2, N2, D2 = 2, 200, 384
    x2 = jax.random.normal(jax.random.PRNGKey(1), (B2, N2, D2), dtype=jnp.float32)
    pe2 = make_sinusoidal_pe(N2, D2)
    ref2 = reference_jax(x2, pe2)
    out2 = jax.block_until_ready(
        sinusoidal_position_embeddings(x2, pe2, block_rows=64, force_pallas=True))
    assert jnp.allclose(out2, ref2, atol=1e-6, rtol=1e-6), \
        float(jnp.max(jnp.abs(out2 - ref2)))

    print("KERNEL_OK")
</pallas_src>

<mosaic_0001>
module attributes {stable_mosaic.version = 11 : i64} {
  func.func @_add_pe_kernel(%arg0: i32, %arg1: i32, %arg2: memref<2x16x384xf32, #tpu.memory_space<vmem>>, %arg3: memref<16x384xf32, #tpu.memory_space<vmem>>, %arg4: memref<2x16x384xf32, #tpu.memory_space<vmem>>) attributes {dimension_semantics = [#tpu.dimension_semantics<parallel>, #tpu.dimension_semantics<parallel>], iteration_bounds = array<i64: 1, 1>, scalar_prefetch = 0 : i64, scratch_operands = 0 : i64, tpu.core_type = #tpu.core_type<tc>, window_params = [{transform_indices = @transform_0, window_bounds = array<i64: 2, 16, 384>}, {transform_indices = @transform_1, window_bounds = array<i64: 16, 384>}, {transform_indices = @transform_2, window_bounds = array<i64: 2, 16, 384>}]} {
    %c0 = arith.constant 0 : index
    %c0_0 = arith.constant 0 : index
    %c0_1 = arith.constant 0 : index
    %0 = vector.load %arg2[%c0, %c0_0, %c0_1] : memref<2x16x384xf32, #tpu.memory_space<vmem>>, vector<2x16x384xf32>
    %c0_2 = arith.constant 0 : index
    %c0_3 = arith.constant 0 : index
    %1 = vector.load %arg3[%c0_2, %c0_3] : memref<16x384xf32, #tpu.memory_space<vmem>>, vector<16x384xf32>
    %2 = vector.shape_cast %1 : vector<16x384xf32> to vector<1x16x384xf32>
    %3 = vector.broadcast %2 : vector<1x16x384xf32> to vector<2x16x384xf32>
    %4 = arith.addf %0, %3 : vector<2x16x384xf32>
    %c0_4 = arith.constant 0 : index
    %c0_5 = arith.constant 0 : index
    %c0_6 = arith.constant 0 : index
    %5 = vector.load %arg4[%c0_4, %c0_5, %c0_6] : memref<2x16x384xf32, #tpu.memory_space<vmem>>, vector<2x16x384xf32>
    tpu.vector_store %arg4[%c0_4, %c0_5, %c0_6], %4 {strides = array<i32>} : memref<2x16x384xf32, #tpu.memory_space<vmem>>, vector<2x16x384xf32>,
    return
  }
  func.func @transform_0(%arg0: i32, %arg1: i32) -> (i32, i32, i32) {
    %c0_i32 = arith.constant 0 : i32
    %c0_i32_0 = arith.constant 0 : i32
    return %arg0, %arg1, %c0_i32 : i32, i32, i32
  }
  func.func @transform_1(%arg0: i32, %arg1: i32) -> (i32, i32) {
    %c0_i32 = arith.constant 0 : i32
    %c0_i32_0 = arith.constant 0 : i32
    return %arg1, %c0_i32 : i32, i32
  }
  func.func @transform_2(%arg0: i32, %arg1: i32) -> (i32, i32, i32) {
    %c0_i32 = arith.constant 0 : i32
    %c0_i32_0 = arith.constant 0 : i32
    return %arg0, %arg1, %c0_i32 : i32, i32, i32
  }
}

</mosaic_0001>

<llo_original>
// kernel: tpu_custom_call.1
$region0: #{tpu_custom_call.1}
  #allocation0 [shape = 'u32[]', space=smem, size = 0x4, offset = 0x4, fixed_abs, tag = 'smem constant byte address 0x4 - core index']
  #allocation1 [shape = 'u32[72,128]{1,0:T(1,128)}', space=vmem, size = 0x9000, scoped, tag = 'internal scratch']
  %s0 = inlined_call_operand.hbm [shape: f32[2,16,384], index: 0, kind: input, shape index: {}, may-alias: {0,2}]
  %s1 = inlined_call_operand.vmem [shape: f32[16,384], index: 1, kind: input, shape index: {}]
  %s2 = inlined_call_operand.hbm [shape: f32[2,16,384], index: 2, kind: output, shape index: {}, may-alias: {0,2}]
  %s3 = sld [smem:[#allocation0]]
  $region22: #{tpu_custom_call.1} parent=0
    _
  %s5 = ssub.s32 1, %s3
  %s6 = scalar_select 0, %s5, %s3
  $region1: #{tpu_custom_call.1} parent=0
    #allocation2 [shape = 'u8[49152]{0}', space=vmem, size = 0xc000, scoped, tag = 'input window, operand 0, single buffered']
    #allocation3 [shape = 's32[1]{0}', space=sflag, size = 0x4, scoped, tag = 'scoped memory for tpu_custom_call.1']
    #allocation4 [shape = 's32[1]{0}', space=sflag, size = 0x4, scoped, tag = 'scoped memory for tpu_custom_call.1']
    #allocation5 [shape = 'u8[49152]{0}', space=vmem, size = 0xc000, scoped, tag = 'output window, operand 0, single buffered']
    %7 = vsyncpa [#allocation3], 0
    %8 = vsyncpa [#allocation4], 0
    // Predicated region
    $region2: #{tpu_custom_call.1} parent=1 // pred_check
      _
    $region3: #{tpu_custom_call.1} parent=1 // pred_check_branch
      %10 = sbr.rel (0) target = $region5
    $region4: #{tpu_custom_call.1} parent=1 // pred_region
      %12 = vsyncadd [#allocation3], 0
      %s13 = sshll.u32 %s0, 4
      %s14 = int_to_ptr.hbm [resolvable:$true] %s13
      %s15 = sshll.u32 [#allocation2], 4
      %s16 = int_to_ptr.vmem [resolvable:$true] %s15
      %21 = dma.hbm_to_vmem [thread:$0]  %s14, 1536, %s16, [#allocation3], 384, 384, 24
    $region5: #{tpu_custom_call.1} parent=1 // pred_fallthru
      _
    // Predicated region
    $region6: #{tpu_custom_call.1} parent=1 // pred_check
      _
    $region7: #{tpu_custom_call.1} parent=1 // pred_check_branch
      %23 = sbr.rel (0) target = $region9
    $region8: #{tpu_custom_call.1} parent=1 // pred_region
      _
    $region9: #{tpu_custom_call.1} parent=1 // pred_fallthru
      _
    // Predicated region
    $region10: #{tpu_custom_call.1} parent=1 // pred_check
      _
    $region11: #{tpu_custom_call.1} parent=1 // pred_check_branch
      %25 = sbr.rel (0) target = $region13
    $region12: #{tpu_custom_call.1} parent=1 // pred_region
      %27 = dma.done [#allocation3], 1536
    $region13: #{tpu_custom_call.1} parent=1 // pred_fallthru
      _
    %v28 = vld [vmem:[#allocation2] sm:$0xff]
    %v29 = vld [vmem:[#allocation2 + $0x8] sm:$0xff]
    %v30 = vld [vmem:[#allocation2 + $0x10] sm:$0xff]
    %v31 = vld [vmem:[#allocation2 + $0x18] sm:$0xff]
    %v32 = vld [vmem:[#allocation2 + $0x20] sm:$0xff]
    %v33 = vld [vmem:[#allocation2 + $0x28] sm:$0xff]
    %v34 = vld [vmem:[#allocation2 + $0x30] sm:$0xff]
    %v35 = vld [vmem:[#allocation2 + $0x38] sm:$0xff]
    %v36 = vld [vmem:[#allocation2 + $0x40] sm:$0xff]
    %v37 = vld [vmem:[#allocation2 + $0x48] sm:$0xff]
    %v38 = vld [vmem:[#allocation2 + $0x50] sm:$0xff]
    %v39 = vld [vmem:[#allocation2 + $0x58] sm:$0xff]
    %v40 = vld [vmem:[%s1] sm:$0xff]
    %v41 = vld [vmem:[%s1 + $0x8] sm:$0xff]
    %v42 = vld [vmem:[%s1 + $0x10] sm:$0xff]
    %v43 = vld [vmem:[%s1 + $0x18] sm:$0xff]
    %v44 = vld [vmem:[%s1 + $0x20] sm:$0xff]
    %v45 = vld [vmem:[%s1 + $0x28] sm:$0xff]
    %v46 = vadd.f32 %v28, %v40
    %v47 = vadd.f32 %v29, %v41
    %v48 = vadd.f32 %v30, %v42
    %v49 = vadd.f32 %v31, %v43
    %v50 = vadd.f32 %v32, %v44
    %v51 = vadd.f32 %v33, %v45
    %v52 = vadd.f32 %v34, %v40
    %v53 = vadd.f32 %v35, %v41
    %v54 = vadd.f32 %v36, %v42
    %v55 = vadd.f32 %v37, %v43
    %v56 = vadd.f32 %v38, %v44
    %v57 = vadd.f32 %v39, %v45
    %58 = vst [vmem:[#allocation5] sm:$0xff] %v46
    %59 = vst [vmem:[#allocation5 + $0x8] sm:$0xff] %v47
    %60 = vst [vmem:[#allocation5 + $0x10] sm:$0xff] %v48
    %61 = vst [vmem:[#allocation5 + $0x18] sm:$0xff] %v49
    %62 = vst [vmem:[#allocation5 + $0x20] sm:$0xff] %v50
    %63 = vst [vmem:[#allocation5 + $0x28] sm:$0xff] %v51
    %64 = vst [vmem:[#allocation5 + $0x30] sm:$0xff] %v52
    %65 = vst [vmem:[#allocation5 + $0x38] sm:$0xff] %v53
    %66 = vst [vmem:[#allocation5 + $0x40] sm:$0xff] %v54
    %67 = vst [vmem:[#allocation5 + $0x48] sm:$0xff] %v55
    %68 = vst [vmem:[#allocation5 + $0x50] sm:$0xff] %v56
    %69 = vst [vmem:[#allocation5 + $0x58] sm:$0xff] %v57
    // Predicated region
    $region14: #{tpu_custom_call.1} parent=1 // pred_check
      _
    $region15: #{tpu_custom_call.1} parent=1 // pred_check_branch
      %71 = sbr.rel (0) target = $region17
    $region16: #{tpu_custom_call.1} parent=1 // pred_region
      %73 = vsyncadd [#allocation4], 0
      %s74 = sshll.u32 [#allocation5], 4
      %s75 = int_to_ptr.vmem [resolvable:$true] %s74
      %s76 = sshll.u32 %s2, 4
      %s77 = int_to_ptr.hbm [resolvable:$true] %s76
      %82 = dma.vmem_to_hbm [thread:$0]  %s75, 1536, %s77, [#allocation4], 384, 384, 24
    $region17: #{tpu_custom_call.1} parent=1 // pred_fallthru
      _
    // Predicated region
    $region18: #{tpu_custom_call.1} parent=1 // pred_check
      _
    $region19: #{tpu_custom_call.1} parent=1 // pred_check_branch
      %84 = sbr.rel (0) target = $region21
    $region20: #{tpu_custom_call.1} parent=1 // pred_region
      %86 = dma.done [#allocation4], 1536
    $region21: #{tpu_custom_call.1} parent=1 // pred_fallthru
      _
    %87 = vsyncpa [#allocation3], 1
    %88 = vsyncpa [#allocation4], 1

</llo_original>
